<compile_context>
chip_gen: v7x
topology: tpu7x:2x2x1
jax: 0.10.0
libtpu: 0.0.40
codegen_flags: <defaults>
</compile_context>

<pallas_src>
import functools
import math

import jax
import jax.numpy as jnp
from jax.experimental import pallas as pl
from jax.experimental.pallas import tpu as pltpu


def _time_embedding_kernel(in_dim, t_ref, consts_ref, w1_ref, w2_hbm, o_ref,
                           w2_vmem, sem):
    # Start the w2 HBM->VMEM copy immediately so it overlaps with the
    # sinusoid, the first matmul and the Swish (perf-review item 6).
    cp = pltpu.make_async_copy(w2_hbm, w2_vmem, sem)
    cp.start()

    t = t_ref[...]                               # (B, 1) f32
    scale = consts_ref[0:1, 0:in_dim]            # (1, in_dim)  [freqs, freqs]
    phase = consts_ref[1:2, 0:in_dim]            # (1, in_dim)  [0, pi/2]
    b1 = consts_ref[2:3, :]                      # (1, tc)
    b2 = consts_ref[3:4, :]                      # (1, tc)

    # [sin(arg), cos(arg)] via one EUP pass: cos(x) = sin(x + pi/2).
    arg = t * scale + phase                      # (B, in_dim) f32 (VPU)
    emb = jnp.sin(arg).astype(w1_ref.dtype)      # bf16 MXU input

    h = jnp.dot(emb, w1_ref[...],
                preferred_element_type=jnp.float32) + b1   # (B, tc) f32
    h = h * jax.nn.sigmoid(h)                    # Swish, f32

    cp.wait()                                    # w2 now resident in VMEM
    out = jnp.dot(h.astype(w2_vmem.dtype), w2_vmem[...],
                  preferred_element_type=jnp.float32) + b2
    o_ref[...] = out.astype(o_ref.dtype)


def make_time_embedding(time_channels, w1, b1, w2, b2):
    """One-time preparation (bf16 casts, packing); returns `apply(t) -> (B, tc)`.

    w1: (tc//4, tc), b1: (tc,), w2: (tc, tc), b2: (tc,)   -- all f32.
    """
    half_dim = time_channels // 8
    in_dim = time_channels // 4
    assert w1.shape == (in_dim, time_channels)
    assert w2.shape == (time_channels, time_channels)

    # Sinusoidal frequency table (PyTorch: exp(arange(half)*-log(1e4)/(half-1))).
    emb_scale = math.log(10000.0) / (half_dim - 1)
    freqs = jnp.exp(jnp.arange(half_dim, dtype=jnp.float32) * -emb_scale)

    # Pack all small constants into one (4, tc) f32 block (item 5):
    #   row 0: [freqs, freqs, 0...]   (scale)
    #   row 1: [0,     pi/2,  0...]   (phase; cos via sin(x + pi/2))
    #   row 2: b1
    #   row 3: b2
    consts = jnp.zeros((4, time_channels), jnp.float32)
    consts = consts.at[0, :in_dim].set(jnp.concatenate([freqs, freqs]))
    consts = consts.at[1, half_dim:in_dim].set(jnp.full((half_dim,), math.pi / 2,
                                                        jnp.float32))
    consts = consts.at[2, :].set(b1.astype(jnp.float32))
    consts = consts.at[3, :].set(b2.astype(jnp.float32))

    # Hoisted, one-time bf16 weight casts (item 1).
    w1_bf = w1.astype(jnp.bfloat16)
    w2_bf = w2.astype(jnp.bfloat16)

    kernel = functools.partial(_time_embedding_kernel, in_dim)
    full = lambda shape: pl.BlockSpec(shape, lambda: (0,) * len(shape))

    @jax.jit
    def apply(t):
        B = t.shape[0]
        t2 = t.astype(jnp.float32).reshape(B, 1)   # metadata-only reshape
        return pl.pallas_call(
            kernel,
            out_shape=jax.ShapeDtypeStruct((B, time_channels), jnp.float32),
            in_specs=[
                full((B, 1)),                       # t
                full((4, time_channels)),           # packed constants (f32)
                full((in_dim, time_channels)),      # w1 (bf16)
                pl.BlockSpec(memory_space=pl.ANY),  # w2 (bf16), manual DMA
            ],
            out_specs=full((B, time_channels)),
            scratch_shapes=[
                pltpu.VMEM((time_channels, time_channels), jnp.bfloat16),
                pltpu.SemaphoreType.DMA,
            ],
        )(t2, consts, w1_bf, w2_bf)

    return apply


if __name__ == "__main__":
    time_channels = 256            # lin1: tc//4 -> tc, lin2: tc -> tc
    half_dim = time_channels // 8  # 32
    in_dim = time_channels // 4    # 64
    B = 8

    key = jax.random.PRNGKey(0)
    k_t, k_w1, k_b1, k_w2, k_b2 = jax.random.split(key, 5)

    # Deterministic parameter init (PyTorch Linear-style uniform bounds).
    bound1 = 1.0 / math.sqrt(in_dim)
    w1 = jax.random.uniform(k_w1, (in_dim, time_channels), jnp.float32,
                            -bound1, bound1)
    b1 = jax.random.uniform(k_b1, (time_channels,), jnp.float32,
                            -bound1, bound1)
    bound2 = 1.0 / math.sqrt(time_channels)
    w2 = jax.random.uniform(k_w2, (time_channels, time_channels), jnp.float32,
                            -bound2, bound2)
    b2 = jax.random.uniform(k_b2, (time_channels,), jnp.float32,
                            -bound2, bound2)

    # Timesteps (diffusion step indices), float32.
    t = jax.random.randint(k_t, (B,), 0, 1000).astype(jnp.float32)

    apply_fn = make_time_embedding(time_channels, w1, b1, w2, b2)
    out = jax.block_until_ready(apply_fn(t))
    assert out.shape == (B, time_channels)

    # References.
    emb_scale = math.log(10000.0) / (half_dim - 1)
    freqs = jnp.exp(jnp.arange(half_dim, dtype=jnp.float32) * -emb_scale)

    def reference_f32(t):
        emb = t[:, None] * freqs[None, :]
        emb = jnp.concatenate([jnp.sin(emb), jnp.cos(emb)], axis=-1)
        h = emb @ w1 + b1
        h = h * jax.nn.sigmoid(h)
        return h @ w2 + b2

    def reference_bf16(t):
        emb = t[:, None] * freqs[None, :]
        emb = jnp.concatenate([jnp.sin(emb), jnp.cos(emb)], axis=-1)
        h = jnp.dot(emb.astype(jnp.bfloat16), w1.astype(jnp.bfloat16),
                    preferred_element_type=jnp.float32) + b1
        h = h * jax.nn.sigmoid(h)
        return jnp.dot(h.astype(jnp.bfloat16), w2.astype(jnp.bfloat16),
                       preferred_element_type=jnp.float32) + b2

    # Tight check against a reference with identical bf16 dtype handling.
    ref_bf = reference_bf16(t)
    assert jnp.allclose(out, ref_bf, atol=2e-2, rtol=2e-2), (
        float(jnp.max(jnp.abs(out - ref_bf))))

    # Looser check against the pure-f32 PyTorch-equivalent reference.
    ref_f32 = reference_f32(t)
    assert jnp.allclose(out, ref_f32, atol=5e-2, rtol=5e-2), (
        float(jnp.max(jnp.abs(out - ref_f32))))

    print("KERNEL_OK")
</pallas_src>

<mosaic_0001>
module attributes {stable_mosaic.version = 11 : i64} {
  func.func @_time_embedding_kernel(%arg0: memref<8x1xf32, #tpu.memory_space<vmem>>, %arg1: memref<4x256xf32, #tpu.memory_space<vmem>>, %arg2: memref<64x256xbf16, #tpu.memory_space<vmem>>, %arg3: memref<256x256xbf16, #tpu.memory_space<any>>, %arg4: memref<8x256xf32, #tpu.memory_space<vmem>>, %arg5: memref<256x256xbf16, #tpu.memory_space<vmem>>, %arg6: memref<!tpu.dma_semaphore, #tpu.memory_space<semaphore_mem>>) attributes {dimension_semantics = [], scalar_prefetch = 0 : i64, scratch_operands = 2 : i64, tpu.core_type = #tpu.core_type<tc>} {
    tpu.enqueue_dma source(%arg3 : memref<256x256xbf16, #tpu.memory_space<any>>) target(%arg5 : memref<256x256xbf16, #tpu.memory_space<vmem>>) target_semaphore(%arg6 : memref<!tpu.dma_semaphore, #tpu.memory_space<semaphore_mem>>)
    %c0 = arith.constant 0 : index
    %c0_0 = arith.constant 0 : index
    %0 = vector.load %arg0[%c0, %c0_0] : memref<8x1xf32, #tpu.memory_space<vmem>>, vector<8x1xf32>
    %c0_1 = arith.constant 0 : index
    %c0_2 = arith.constant 0 : index
    %1 = vector.load %arg1[%c0_1, %c0_2] : memref<4x256xf32, #tpu.memory_space<vmem>>, vector<1x64xf32>
    %c1 = arith.constant 1 : index
    %c0_3 = arith.constant 0 : index
    %2 = vector.load %arg1[%c1, %c0_3] : memref<4x256xf32, #tpu.memory_space<vmem>>, vector<1x64xf32>
    %c2 = arith.constant 2 : index
    %c0_4 = arith.constant 0 : index
    %3 = vector.load %arg1[%c2, %c0_4] : memref<4x256xf32, #tpu.memory_space<vmem>>, vector<1x256xf32>
    %c3 = arith.constant 3 : index
    %c0_5 = arith.constant 0 : index
    %4 = vector.load %arg1[%c3, %c0_5] : memref<4x256xf32, #tpu.memory_space<vmem>>, vector<1x256xf32>
    %5 = vector.broadcast %0 : vector<8x1xf32> to vector<8x64xf32>
    %6 = vector.broadcast %1 : vector<1x64xf32> to vector<8x64xf32>
    %7 = arith.mulf %5, %6 : vector<8x64xf32>
    %8 = vector.broadcast %2 : vector<1x64xf32> to vector<8x64xf32>
    %9 = arith.addf %7, %8 : vector<8x64xf32>
    %10 = math.sin %9 : vector<8x64xf32>
    %11 = arith.truncf %10 : vector<8x64xf32> to vector<8x64xbf16>
    %c0_6 = arith.constant 0 : index
    %c0_7 = arith.constant 0 : index
    %12 = vector.load %arg2[%c0_6, %c0_7] : memref<64x256xbf16, #tpu.memory_space<vmem>>, vector<64x256xbf16>
    %cst = arith.constant dense<0.000000e+00> : vector<8x256xf32>
    %13 = tpu.matmul %11, %12, %cst {dimension_numbers = #tpu.dot_dimension_numbers<[1], [0], [0], [1], [0, 0, 1, 1], [], []>} : vector<8x64xbf16>, vector<64x256xbf16>, vector<8x256xf32> -> vector<8x256xf32>
    %14 = vector.broadcast %3 : vector<1x256xf32> to vector<8x256xf32>
    %15 = arith.addf %13, %14 : vector<8x256xf32>
    %16 = arith.negf %15 : vector<8x256xf32>
    %17 = math.exp %16 : vector<8x256xf32>
    %cst_8 = arith.constant 1.000000e+00 : f32
    %18 = vector.broadcast %cst_8 : f32 to vector<8x256xf32>
    %19 = arith.addf %18, %17 : vector<8x256xf32>
    %20 = arith.divf %18, %19 : vector<8x256xf32>
    %21 = arith.mulf %15, %20 : vector<8x256xf32>
    tpu.wait_dma2 semaphore(%arg6 : memref<!tpu.dma_semaphore, #tpu.memory_space<semaphore_mem>>) src(%arg3 : memref<256x256xbf16, #tpu.memory_space<any>>) dst(%arg5 : memref<256x256xbf16, #tpu.memory_space<vmem>>)
    %22 = arith.truncf %21 : vector<8x256xf32> to vector<8x256xbf16>
    %c0_9 = arith.constant 0 : index
    %c0_10 = arith.constant 0 : index
    %23 = vector.load %arg5[%c0_9, %c0_10] : memref<256x256xbf16, #tpu.memory_space<vmem>>, vector<256x256xbf16>
    %cst_11 = arith.constant dense<0.000000e+00> : vector<8x256xf32>
    %24 = tpu.matmul %22, %23, %cst_11 {dimension_numbers = #tpu.dot_dimension_numbers<[1], [0], [0], [1], [0, 0, 1, 1], [], []>} : vector<8x256xbf16>, vector<256x256xbf16>, vector<8x256xf32> -> vector<8x256xf32>
    %25 = vector.broadcast %4 : vector<1x256xf32> to vector<8x256xf32>
    %26 = arith.addf %24, %25 : vector<8x256xf32>
    %c0_12 = arith.constant 0 : index
    %c0_13 = arith.constant 0 : index
    %27 = vector.load %arg4[%c0_12, %c0_13] : memref<8x256xf32, #tpu.memory_space<vmem>>, vector<8x256xf32>
    tpu.vector_store %arg4[%c0_12, %c0_13], %26 {strides = array<i32>} : memref<8x256xf32, #tpu.memory_space<vmem>>, vector<8x256xf32>,
    return
  }
}

</mosaic_0001>

<llo_original>
// kernel: apply.1
$region0: #{apply.1}
  #allocation0 [shape = 'u32[]', space=smem, size = 0x4, offset = 0x4, fixed_abs, tag = 'smem constant byte address 0x4 - core index']
  #allocation1 [shape = 'u32[144,128]{1,0:T(1,128)}', space=vmem, size = 0x12000, scoped, tag = 'internal scratch']
  #allocation2 [shape = 'bf16[256,256]{1,0:T(16,128)(2,1)}', space=vmem, size = 0x20000, scoped, tag = 'scratch operand']
  #allocation3 [shape = 's32[1]{0}', space=sflag, size = 0x4, scoped, tag = 'scratch operand']
  #allocation6 [shape = 's32[]', space=sflag, size = 0x4, offset = 0, fixed_abs, tag = 'sflag constant byte address 0x0 - dummy sync flag']
  %s0 = inlined_call_operand.vmem [shape: f32[8,1], index: 0, kind: input, shape index: {}]
  %s1 = inlined_call_operand.vmem [shape: f32[4,256], index: 1, kind: input, shape index: {}]
  %s2 = inlined_call_operand.vmem [shape: bf16[64,256], index: 2, kind: input, shape index: {}]
  %s3 = inlined_call_operand.vmem [shape: bf16[256,256], index: 3, kind: input, shape index: {}]
  %s4 = inlined_call_operand.hbm [shape: f32[8,256], index: 4, kind: output, shape index: {}]
  %s5 = sld [smem:[#allocation0]]
  $region59: #{apply.1} parent=0
    _
  %s7 = ssub.s32 1, %s5
  %s8 = scalar_select 0, %s7, %s5
  $region1: #{apply.1} parent=0
    #allocation4 [shape = 'u8[8192]{0}', space=vmem, size = 0x2000, scoped, tag = 'output window, operand 0, single buffered']
    #allocation5 [shape = 's32[1]{0}', space=sflag, size = 0x4, scoped, tag = 'scoped memory for apply.1']
    %9 = vsyncpa [#allocation5], 0
    // Predicated region
    $region2: #{apply.1} parent=1 // pred_check
      _
    $region3: #{apply.1} parent=1 // pred_check_branch
      %11 = sbr.rel (0) target = $region5
    $region4: #{apply.1} parent=1 // pred_region
      _
    $region5: #{apply.1} parent=1 // pred_fallthru
      _
    // Predicated region
    $region6: #{apply.1} parent=1 // pred_check
      _
    $region7: #{apply.1} parent=1 // pred_check_branch
      %13 = sbr.rel (0) target = $region9
    $region8: #{apply.1} parent=1 // pred_region
      _
    $region9: #{apply.1} parent=1 // pred_fallthru
      _
    // Predicated region
    $region10: #{apply.1} parent=1 // pred_check
      _
    $region11: #{apply.1} parent=1 // pred_check_branch
      %15 = sbr.rel (0) target = $region13
    $region12: #{apply.1} parent=1 // pred_region
      _
    $region13: #{apply.1} parent=1 // pred_fallthru
      _
    %p18 = scmp.lt.u32.totalorder 4, 8
    %p19 = pneg %p18
    // Predicated region
    $region14: #{apply.1} parent=1 // pred_check
      _
    $region15: #{apply.1} parent=1 // pred_check_branch
      %21 = sbr.rel (%p18) target = $region17
    $region16: #{apply.1} parent=1 // pred_region
      %s162 = sand.u32 4, 7
      %p163 = scmp.eq.s32.totalorder %s162, 0
      %p164 = pneg %p163
      // Predicated region
      $region29: #{apply.1} parent=16 // pred_check
        _
      $region30: #{apply.1} parent=16 // pred_check_branch
        %166 = sbr.rel (%p163) target = $region32
      $region31: #{apply.1} parent=16 // pred_region
        %s167 = sand.u32 4, 7
        %s168 = ssub.s32 4, %s167
        %s169 = scalar_lea.vmem %s3, %s168
        %s170 = ssub.s32 4, %s167
        %s171 = scalar_lea.vmem [#allocation2], %s170
        loop: start=0, step=1, limit=1
        $region33: #{apply.1} parent=31 // loop_pre_header
          _
        $region34: #{apply.1} parent=31 // loop_header
          %s173 = sphi 0, %s177
          %p174 = scmp.ge.s32.totalorder %s173, 1
          %s178 = sphi %s3, %s3
          %s179 = sphi [#allocation2], [#allocation2]
        $region35: #{apply.1} parent=31 // loop_header_branch
          %176 = sbr.rel (%p174) target = $region39
        $region36: #{apply.1} parent=31 // loop_body
          _
        $region37: #{apply.1} parent=31 // loop_footer
          %s177 = sadd.s32 1, %s173
        $region38: #{apply.1} parent=31 // loop_footer_branch
          %172 = sbr.rel target = $region34
        $region39: #{apply.1} parent=31 // loop_exit
          _
        %s180 = sshllo.u32 0, %s167
        loop: start=0, step=1, limit=1
        $region40: #{apply.1} parent=31 // loop_pre_header
          _
        $region41: #{apply.1} parent=31 // loop_header
          %s182 = sphi 0, %s186
          %p183 = scmp.ge.s32.totalorder %s182, 1
          %s187 = sphi %s169, %s169
          %s188 = sphi %s171, %s171
        $region42: #{apply.1} parent=31 // loop_header_branch
          %185 = sbr.rel (%p183) target = $region46
        $region43: #{apply.1} parent=31 // loop_body
          %v189 = vld [vmem:[%s187] sm:%s180]
          %190 = vst [vmem:[%s188] sm:%s180] %v189
          %v191 = vld [vmem:[%s187 + $0x8] sm:%s180]
          %192 = vst [vmem:[%s188 + $0x4] sm:%s180] %v191
          %v193 = vld [vmem:[%s187 + $0x4] sm:%s180]
          %194 = vst [vmem:[%s188 + $0x8] sm:%s180] %v193
          %v195 = vld [vmem:[%s187 + $0xc] sm:%s180]
          %196 = vst [vmem:[%s188 + $0xc] sm:%s180] %v195
          %v197 = vld [vmem:[%s187 + $0x10] sm:%s180]
          %198 = vst [vmem:[%s188 + $0x10] sm:%s180] %v197
          %v199 = vld [vmem:[%s187 + $0x18] sm:%s180]
          %200 = vst [vmem:[%s188 + $0x14] sm:%s180] %v199
          %v201 = vld [vmem:[%s187 + $0x14] sm:%s180]
          %202 = vst [vmem:[%s188 + $0x18] sm:%s180] %v201
          %v203 = vld [vmem:[%s187 + $0x1c] sm:%s180]
          %204 = vst [vmem:[%s188 + $0x1c] sm:%s180] %v203
          %v205 = vld [vmem:[%s187 + $0x20] sm:%s180]
          %206 = vst [vmem:[%s188 + $0x20] sm:%s180] %v205
          %v207 = vld [vmem:[%s187 + $0x28] sm:%s180]
          %208 = vst [vmem:[%s188 + $0x24] sm:%s180] %v207
          %v209 = vld [vmem:[%s187 + $0x24] sm:%s180]
          %210 = vst [vmem:[%s188 + $0x28] sm:%s180] %v209
          %v211 = vld [vmem:[%s187 + $0x2c] sm:%s180]
          %212 = vst [vmem:[%s188 + $0x2c] sm:%s180] %v211
          %v213 = vld [vmem:[%s187 + $0x30] sm:%s180]
          %214 = vst [vmem:[%s188 + $0x30] sm:%s180] %v213
          %v215 = vld [vmem:[%s187 + $0x38] sm:%s180]
          %216 = vst [vmem:[%s188 + $0x34] sm:%s180] %v215
          %v217 = vld [vmem:[%s187 + $0x34] sm:%s180]
          %218 = vst [vmem:[%s188 + $0x38] sm:%s180] %v217
          %v219 = vld [vmem:[%s187 + $0x3c] sm:%s180]
          %220 = vst [vmem:[%s188 + $0x3c] sm:%s180] %v219
          %v221 = vld [vmem:[%s187 + $0x40] sm:%s180]
          %222 = vst [vmem:[%s188 + $0x40] sm:%s180] %v221
          %v223 = vld [vmem:[%s187 + $0x48] sm:%s180]
          %224 = vst [vmem:[%s188 + $0x44] sm:%s180] %v223
          %v225 = vld [vmem:[%s187 + $0x44] sm:%s180]
          %226 = vst [vmem:[%s188 + $0x48] sm:%s180] %v225
          %v227 = vld [vmem:[%s187 + $0x4c] sm:%s180]
          %228 = vst [vmem:[%s188 + $0x4c] sm:%s180] %v227
          %v229 = vld [vmem:[%s187 + $0x50] sm:%s180]
          %230 = vst [vmem:[%s188 + $0x50] sm:%s180] %v229
          %v231 = vld [vmem:[%s187 + $0x58] sm:%s180]
          %232 = vst [vmem:[%s188 + $0x54] sm:%s180] %v231
          %v233 = vld [vmem:[%s187 + $0x54] sm:%s180]
          %234 = vst [vmem:[%s188 + $0x58] sm:%s180] %v233
          %v235 = vld [vmem:[%s187 + $0x5c] sm:%s180]
          %236 = vst [vmem:[%s188 + $0x5c] sm:%s180] %v235
          %v237 = vld [vmem:[%s187 + $0x60] sm:%s180]
          %238 = vst [vmem:[%s188 + $0x60] sm:%s180] %v237
          %v239 = vld [vmem:[%s187 + $0x68] sm:%s180]
          %240 = vst [vmem:[%s188 + $0x64] sm:%s180] %v239
          %v241 = vld [vmem:[%s187 + $0x64] sm:%s180]
          %242 = vst [vmem:[%s188 + $0x68] sm:%s180] %v241
          %v243 = vld [vmem:[%s187 + $0x6c] sm:%s180]
          %244 = vst [vmem:[%s188 + $0x6c] sm:%s180] %v243
          %v245 = vld [vmem:[%s187 + $0x70] sm:%s180]
          %246 = vst [vmem:[%s188 + $0x70] sm:%s180] %v245
          %v247 = vld [vmem:[%s187 + $0x78] sm:%s180]
          %248 = vst [vmem:[%s188 + $0x74] sm:%s180] %v247
          %v249 = vld [vmem:[%s187 + $0x74] sm:%s180]
          %250 = vst [vmem:[%s188 + $0x78] sm:%s180] %v249
          %v251 = vld [vmem:[%s187 + $0x7c] sm:%s180]
          %252 = vst [vmem:[%s188 + $0x7c] sm:%s180] %v251
          %v253 = vld [vmem:[%s187 + $0x80] sm:%s180]
          %254 = vst [vmem:[%s188 + $0x80] sm:%s180] %v253
          %v255 = vld [vmem:[%s187 + $0x88] sm:%s180]
          %256 = vst [vmem:[%s188 + $0x84] sm:%s180] %v255
          %v257 = vld [vmem:[%s187 + $0x84] sm:%s180]
          %258 = vst [vmem:[%s188 + $0x88] sm:%s180] %v257
          %v259 = vld [vmem:[%s187 + $0x8c] sm:%s180]
          %260 = vst [vmem:[%s188 + $0x8c] sm:%s180] %v259
          %v261 = vld [vmem:[%s187 + $0x90] sm:%s180]
          %262 = vst [vmem:[%s188 + $0x90] sm:%s180] %v261
          %v263 = vld [vmem:[%s187 + $0x98] sm:%s180]
          %264 = vst [vmem:[%s188 + $0x94] sm:%s180] %v263
          %v265 = vld [vmem:[%s187 + $0x94] sm:%s180]
          %266 = vst [vmem:[%s188 + $0x98] sm:%s180] %v265
          %v267 = vld [vmem:[%s187 + $0x9c] sm:%s180]
          %268 = vst [vmem:[%s188 + $0x9c] sm:%s180] %v267
          %v269 = vld [vmem:[%s187 + $0xa0] sm:%s180]
          %270 = vst [vmem:[%s188 + $0xa0] sm:%s180] %v269
          %v271 = vld [vmem:[%s187 + $0xa8] sm:%s180]
          %272 = vst [vmem:[%s188 + $0xa4] sm:%s180] %v271
          %v273 = vld [vmem:[%s187 + $0xa4] sm:%s180]
          %274 = vst [vmem:[%s188 + $0xa8] sm:%s180] %v273
          %v275 = vld [vmem:[%s187 + $0xac] sm:%s180]
          %276 = vst [vmem:[%s188 + $0xac] sm:%s180] %v275
          %v277 = vld [vmem:[%s187 + $0xb0] sm:%s180]
          %278 = vst [vmem:[%s188 + $0xb0] sm:%s180] %v277
          %v279 = vld [vmem:[%s187 + $0xb8] sm:%s180]
          %280 = vst [vmem:[%s188 + $0xb4] sm:%s180] %v279
          %v281 = vld [vmem:[%s187 + $0xb4] sm:%s180]
          %282 = vst [vmem:[%s188 + $0xb8] sm:%s180] %v281
          %v283 = vld [vmem:[%s187 + $0xbc] sm:%s180]
          %284 = vst [vmem:[%s188 + $0xbc] sm:%s180] %v283
          %v285 = vld [vmem:[%s187 + $0xc0] sm:%s180]
          %286 = vst [vmem:[%s188 + $0xc0] sm:%s180] %v285
          %v287 = vld [vmem:[%s187 + $0xc8] sm:%s180]
          %288 = vst [vmem:[%s188 + $0xc4] sm:%s180] %v287
          %v289 = vld [vmem:[%s187 + $0xc4] sm:%s180]
          %290 = vst [vmem:[%s188 + $0xc8] sm:%s180] %v289
          %v291 = vld [vmem:[%s187 + $0xcc] sm:%s180]
          %292 = vst [vmem:[%s188 + $0xcc] sm:%s180] %v291
          %v293 = vld [vmem:[%s187 + $0xd0] sm:%s180]
          %294 = vst [vmem:[%s188 + $0xd0] sm:%s180] %v293
          %v295 = vld [vmem:[%s187 + $0xd8] sm:%s180]
          %296 = vst [vmem:[%s188 + $0xd4] sm:%s180] %v295
          %v297 = vld [vmem:[%s187 + $0xd4] sm:%s180]
          %298 = vst [vmem:[%s188 + $0xd8] sm:%s180] %v297
          %v299 = vld [vmem:[%s187 + $0xdc] sm:%s180]
          %300 = vst [vmem:[%s188 + $0xdc] sm:%s180] %v299
          %v301 = vld [vmem:[%s187 + $0xe0] sm:%s180]
          %302 = vst [vmem:[%s188 + $0xe0] sm:%s180] %v301
          %v303 = vld [vmem:[%s187 + $0xe8] sm:%s180]
          %304 = vst [vmem:[%s188 + $0xe4] sm:%s180] %v303
          %v305 = vld [vmem:[%s187 + $0xe4] sm:%s180]
          %306 = vst [vmem:[%s188 + $0xe8] sm:%s180] %v305
          %v307 = vld [vmem:[%s187 + $0xec] sm:%s180]
          %308 = vst [vmem:[%s188 + $0xec] sm:%s180] %v307
          %v309 = vld [vmem:[%s187 + $0xf0] sm:%s180]
          %310 = vst [vmem:[%s188 + $0xf0] sm:%s180] %v309
          %v311 = vld [vmem:[%s187 + $0xf8] sm:%s180]
          %312 = vst [vmem:[%s188 + $0xf4] sm:%s180] %v311
          %v313 = vld [vmem:[%s187 + $0xf4] sm:%s180]
          %314 = vst [vmem:[%s188 + $0xf8] sm:%s180] %v313
          %v315 = vld [vmem:[%s187 + $0xfc] sm:%s180]
          %316 = vst [vmem:[%s188 + $0xfc] sm:%s180] %v315
        $region44: #{apply.1} parent=31 // loop_footer
          %s186 = sadd.s32 1, %s182
        $region45: #{apply.1} parent=31 // loop_footer_branch
          %181 = sbr.rel target = $region41
        $region46: #{apply.1} parent=31 // loop_exit
          _
      $region32: #{apply.1} parent=16 // pred_fallthru
        _
    $region17: #{apply.1} parent=1 // pred_fallthru
      _
    // Predicated region
    $region18: #{apply.1} parent=1 // pred_check
      %p22 = pneg %p18
    $region19: #{apply.1} parent=1 // pred_check_branch
      %24 = sbr.rel (%p22) target = $region21
    $region20: #{apply.1} parent=1 // pred_region
      %s25 = sshllo.u32 0, 4
      loop: start=0, step=1, limit=1
      $region22: #{apply.1} parent=20 // loop_pre_header
        _
      $region23: #{apply.1} parent=20 // loop_header
        %s27 = sphi 0, %s31
        %p28 = scmp.ge.s32.totalorder %s27, 1
        %s32 = sphi %s3, %s3
        %s33 = sphi [#allocation2], [#allocation2]
      $region24: #{apply.1} parent=20 // loop_header_branch
        %30 = sbr.rel (%p28) target = $region28
      $region25: #{apply.1} parent=20 // loop_body
        %v34 = vld [vmem:[%s32] sm:%s25]
        %35 = vst [vmem:[%s33] sm:%s25] %v34
        %v36 = vld [vmem:[%s32 + $0x8] sm:%s25]
        %37 = vst [vmem:[%s33 + $0x4] sm:%s25] %v36
        %v38 = vld [vmem:[%s32 + $0x4] sm:%s25]
        %39 = vst [vmem:[%s33 + $0x8] sm:%s25] %v38
        %v40 = vld [vmem:[%s32 + $0xc] sm:%s25]
        %41 = vst [vmem:[%s33 + $0xc] sm:%s25] %v40
        %v42 = vld [vmem:[%s32 + $0x10] sm:%s25]
        %43 = vst [vmem:[%s33 + $0x10] sm:%s25] %v42
        %v44 = vld [vmem:[%s32 + $0x18] sm:%s25]
        %45 = vst [vmem:[%s33 + $0x14] sm:%s25] %v44
        %v46 = vld [vmem:[%s32 + $0x14] sm:%s25]
        %47 = vst [vmem:[%s33 + $0x18] sm:%s25] %v46
        %v48 = vld [vmem:[%s32 + $0x1c] sm:%s25]
        %49 = vst [vmem:[%s33 + $0x1c] sm:%s25] %v48
        %v50 = vld [vmem:[%s32 + $0x20] sm:%s25]
        %51 = vst [vmem:[%s33 + $0x20] sm:%s25] %v50
        %v52 = vld [vmem:[%s32 + $0x28] sm:%s25]
        %53 = vst [vmem:[%s33 + $0x24] sm:%s25] %v52
        %v54 = vld [vmem:[%s32 + $0x24] sm:%s25]
        %55 = vst [vmem:[%s33 + $0x28] sm:%s25] %v54
        %v56 = vld [vmem:[%s32 + $0x2c] sm:%s25]
        %57 = vst [vmem:[%s33 + $0x2c] sm:%s25] %v56
        %v58 = vld [vmem:[%s32 + $0x30] sm:%s25]
        %59 = vst [vmem:[%s33 + $0x30] sm:%s25] %v58
        %v60 = vld [vmem:[%s32 + $0x38] sm:%s25]
        %61 = vst [vmem:[%s33 + $0x34] sm:%s25] %v60
        %v62 = vld [vmem:[%s32 + $0x34] sm:%s25]
        %63 = vst [vmem:[%s33 + $0x38] sm:%s25] %v62
        %v64 = vld [vmem:[%s32 + $0x3c] sm:%s25]
        %65 = vst [vmem:[%s33 + $0x3c] sm:%s25] %v64
        %v66 = vld [vmem:[%s32 + $0x40] sm:%s25]
        %67 = vst [vmem:[%s33 + $0x40] sm:%s25] %v66
        %v68 = vld [vmem:[%s32 + $0x48] sm:%s25]
        %69 = vst [vmem:[%s33 + $0x44] sm:%s25] %v68
        %v70 = vld [vmem:[%s32 + $0x44] sm:%s25]
        %71 = vst [vmem:[%s33 + $0x48] sm:%s25] %v70
        %v72 = vld [vmem:[%s32 + $0x4c] sm:%s25]
        %73 = vst [vmem:[%s33 + $0x4c] sm:%s25] %v72
        %v74 = vld [vmem:[%s32 + $0x50] sm:%s25]
        %75 = vst [vmem:[%s33 + $0x50] sm:%s25] %v74
        %v76 = vld [vmem:[%s32 + $0x58] sm:%s25]
        %77 = vst [vmem:[%s33 + $0x54] sm:%s25] %v76
        %v78 = vld [vmem:[%s32 + $0x54] sm:%s25]
        %79 = vst [vmem:[%s33 + $0x58] sm:%s25] %v78
        %v80 = vld [vmem:[%s32 + $0x5c] sm:%s25]
        %81 = vst [vmem:[%s33 + $0x5c] sm:%s25] %v80
        %v82 = vld [vmem:[%s32 + $0x60] sm:%s25]
        %83 = vst [vmem:[%s33 + $0x60] sm:%s25] %v82
        %v84 = vld [vmem:[%s32 + $0x68] sm:%s25]
        %85 = vst [vmem:[%s33 + $0x64] sm:%s25] %v84
        %v86 = vld [vmem:[%s32 + $0x64] sm:%s25]
        %87 = vst [vmem:[%s33 + $0x68] sm:%s25] %v86
        %v88 = vld [vmem:[%s32 + $0x6c] sm:%s25]
        %89 = vst [vmem:[%s33 + $0x6c] sm:%s25] %v88
        %v90 = vld [vmem:[%s32 + $0x70] sm:%s25]
        %91 = vst [vmem:[%s33 + $0x70] sm:%s25] %v90
        %v92 = vld [vmem:[%s32 + $0x78] sm:%s25]
        %93 = vst [vmem:[%s33 + $0x74] sm:%s25] %v92
        %v94 = vld [vmem:[%s32 + $0x74] sm:%s25]
        %95 = vst [vmem:[%s33 + $0x78] sm:%s25] %v94
        %v96 = vld [vmem:[%s32 + $0x7c] sm:%s25]
        %97 = vst [vmem:[%s33 + $0x7c] sm:%s25] %v96
        %v98 = vld [vmem:[%s32 + $0x80] sm:%s25]
        %99 = vst [vmem:[%s33 + $0x80] sm:%s25] %v98
        %v100 = vld [vmem:[%s32 + $0x88] sm:%s25]
        %101 = vst [vmem:[%s33 + $0x84] sm:%s25] %v100
        %v102 = vld [vmem:[%s32 + $0x84] sm:%s25]
        %103 = vst [vmem:[%s33 + $0x88] sm:%s25] %v102
        %v104 = vld [vmem:[%s32 + $0x8c] sm:%s25]
        %105 = vst [vmem:[%s33 + $0x8c] sm:%s25] %v104
        %v106 = vld [vmem:[%s32 + $0x90] sm:%s25]
        %107 = vst [vmem:[%s33 + $0x90] sm:%s25] %v106
        %v108 = vld [vmem:[%s32 + $0x98] sm:%s25]
        %109 = vst [vmem:[%s33 + $0x94] sm:%s25] %v108
        %v110 = vld [vmem:[%s32 + $0x94] sm:%s25]
        %111 = vst [vmem:[%s33 + $0x98] sm:%s25] %v110
        %v112 = vld [vmem:[%s32 + $0x9c] sm:%s25]
        %113 = vst [vmem:[%s33 + $0x9c] sm:%s25] %v112
        %v114 = vld [vmem:[%s32 + $0xa0] sm:%s25]
        %115 = vst [vmem:[%s33 + $0xa0] sm:%s25] %v114
        %v116 = vld [vmem:[%s32 + $0xa8] sm:%s25]
        %117 = vst [vmem:[%s33 + $0xa4] sm:%s25] %v116
        %v118 = vld [vmem:[%s32 + $0xa4] sm:%s25]
        %119 = vst [vmem:[%s33 + $0xa8] sm:%s25] %v118
        %v120 = vld [vmem:[%s32 + $0xac] sm:%s25]
        %121 = vst [vmem:[%s33 + $0xac] sm:%s25] %v120
        %v122 = vld [vmem:[%s32 + $0xb0] sm:%s25]
        %123 = vst [vmem:[%s33 + $0xb0] sm:%s25] %v122
        %v124 = vld [vmem:[%s32 + $0xb8] sm:%s25]
        %125 = vst [vmem:[%s33 + $0xb4] sm:%s25] %v124
        %v126 = vld [vmem:[%s32 + $0xb4] sm:%s25]
        %127 = vst [vmem:[%s33 + $0xb8] sm:%s25] %v126
        %v128 = vld [vmem:[%s32 + $0xbc] sm:%s25]
        %129 = vst [vmem:[%s33 + $0xbc] sm:%s25] %v128
        %v130 = vld [vmem:[%s32 + $0xc0] sm:%s25]
        %131 = vst [vmem:[%s33 + $0xc0] sm:%s25] %v130
        %v132 = vld [vmem:[%s32 + $0xc8] sm:%s25]
        %133 = vst [vmem:[%s33 + $0xc4] sm:%s25] %v132
        %v134 = vld [vmem:[%s32 + $0xc4] sm:%s25]
        %135 = vst [vmem:[%s33 + $0xc8] sm:%s25] %v134
        %v136 = vld [vmem:[%s32 + $0xcc] sm:%s25]
        %137 = vst [vmem:[%s33 + $0xcc] sm:%s25] %v136
        %v138 = vld [vmem:[%s32 + $0xd0] sm:%s25]
        %139 = vst [vmem:[%s33 + $0xd0] sm:%s25] %v138
        %v140 = vld [vmem:[%s32 + $0xd8] sm:%s25]
        %141 = vst [vmem:[%s33 + $0xd4] sm:%s25] %v140
        %v142 = vld [vmem:[%s32 + $0xd4] sm:%s25]
        %143 = vst [vmem:[%s33 + $0xd8] sm:%s25] %v142
        %v144 = vld [vmem:[%s32 + $0xdc] sm:%s25]
        %145 = vst [vmem:[%s33 + $0xdc] sm:%s25] %v144
        %v146 = vld [vmem:[%s32 + $0xe0] sm:%s25]
        %147 = vst [vmem:[%s33 + $0xe0] sm:%s25] %v146
        %v148 = vld [vmem:[%s32 + $0xe8] sm:%s25]
        %149 = vst [vmem:[%s33 + $0xe4] sm:%s25] %v148
        %v150 = vld [vmem:[%s32 + $0xe4] sm:%s25]
        %151 = vst [vmem:[%s33 + $0xe8] sm:%s25] %v150
        %v152 = vld [vmem:[%s32 + $0xec] sm:%s25]
        %153 = vst [vmem:[%s33 + $0xec] sm:%s25] %v152
        %v154 = vld [vmem:[%s32 + $0xf0] sm:%s25]
        %155 = vst [vmem:[%s33 + $0xf0] sm:%s25] %v154
        %v156 = vld [vmem:[%s32 + $0xf8] sm:%s25]
        %157 = vst [vmem:[%s33 + $0xf4] sm:%s25] %v156
        %v158 = vld [vmem:[%s32 + $0xf4] sm:%s25]
        %159 = vst [vmem:[%s33 + $0xf8] sm:%s25] %v158
        %v160 = vld [vmem:[%s32 + $0xfc] sm:%s25]
        %161 = vst [vmem:[%s33 + $0xfc] sm:%s25] %v160
      $region26: #{apply.1} parent=20 // loop_footer
        %s31 = sadd.s32 1, %s27
      $region27: #{apply.1} parent=20 // loop_footer_branch
        %26 = sbr.rel target = $region23
      $region28: #{apply.1} parent=20 // loop_exit
        _
    $region21: #{apply.1} parent=1 // pred_fallthru
      _
    // Predicated region
    $region47: #{apply.1} parent=1 // pred_check
      _
    $region48: #{apply.1} parent=1 // pred_check_branch
      %319 = sbr.rel (0) target = $region50
    $region49: #{apply.1} parent=1 // pred_region
      %320 = vsyncadd [#allocation3], 4096
    $region50: #{apply.1} parent=1 // pred_fallthru
      _
    %v321 = vld [vmem:[%s0] sm:$0xff]
    %v322 = vld [vmem:[%s1] sm:$0x1]
    %v323 = vld [vmem:[%s1 + $0x1] sm:$0x1]
    %s324 = scalar_lea.vmem %s1, 2
    %v325 = vld [vmem:[%s324] ss:$4 sm:$0x3]
    %s326 = scalar_lea.vmem %s1, 3
    %v327 = vld [vmem:[%s326] ss:$4 sm:$0x3]
    %329 = vset.pattern.permute.xlu0 0
    %330 = vperm.xlu0 %329, %v321
    %v331 = vpop.permute.xlu0 %330
    %v333 = vlaneseq
    %v334 = vshrl.u32 %v333, 7
    %v335 = vsub.s32 0, %v334
    %v336 = vrot.slane %v322, %v335
    %v337 = vmul.f32 %v331, %v336
    %v338 = vlaneseq
    %v339 = vshrl.u32 %v338, 7
    %v340 = vsub.s32 0, %v339
    %v341 = vrot.slane %v323, %v340
    %v342 = vadd.f32 %v337, %v341
    %v343 = vand.u32 2147483647, %v342
    %vm344 = vcmp.le.f32.partialorder %v343, 0.7853982
    %vm345 = vcmp.lt.s32.totalorder %v342, 0
    %v346 = vand.u32 %v342, 2139095040
    %v347 = vshrl.u32 %v346, 23
    %v348 = vsub.s32 %v347, 127
    %v349 = vand.u32 2147483647, %v342
    %v350 = vand.u32 %v349, 8388607
    %v351 = vor.u32 %v350, 8388608
    %v352 = vsub.s32 0, %v351
    %v353 = vadd.s32 %v348, 1
    %vm354 = vcmp.gt.s32.totalorder %v353, 0
    %v355 = vsel %vm354, %v353, 0
    %v356 = vshrl.u32 %v355, 5
    %v357 = vand.u32 %v355, 31
    %v358 = vsub.s32 32, %v357
    %v359 = vshrl.u32 683565275, %v358
    %v360 = vshll.u32 683565275, %v357
    %v361 = vshrl.u32 2475754826, %v358
    %v362 = vor.u32 %v360, %v361
    %v363 = vshll.u32 2475754826, %v357
    %v364 = vshrl.u32 2131351028, %v358
    %v365 = vor.u32 %v363, %v364
    %v366 = vshll.u32 2131351028, %v357
    %v367 = vshrl.u32 2102212464, %v358
    %v368 = vor.u32 %v366, %v367
    %v369 = vshll.u32 2102212464, %v357
    %v370 = vshrl.u32 920167782, %v358
    %v371 = vor.u32 %v369, %v370
    %v372 = vshll.u32 920167782, %v357
    %v373 = vshrl.u32 1326507024, %v358
    %v374 = vor.u32 %v372, %v373
    %vm375 = vcmp.lt.s32.totalorder %v356, 1
    %vm376 = vcmp.lt.s32.totalorder %v356, 2
    %vm377 = vcmp.lt.s32.totalorder %v356, 3
    %vm378 = vcmp.lt.s32.totalorder %v356, 4
    %v379 = vsel %vm375, %v359, %v362
    %v380 = vsel %vm378, %v368, 2102212464
    %v381 = vsel %vm377, %v365, %v380
    %v382 = vsel %vm376, %v379, %v381
    %v383 = vsel %vm375, %v362, %v365
    %v384 = vsel %vm378, %v371, 920167782
    %v385 = vsel %vm377, %v368, %v384
    %v386 = vsel %vm376, %v383, %v385
    %v387 = vsel %vm375, %v365, %v368
    %v388 = vsel %vm378, %v374, 1326507024
    %v389 = vsel %vm377, %v371, %v388
    %v390 = vsel %vm376, %v387, %v389
    %v391 = vshll.u32 %v351, 8
    %v392 = vmul.u32.u64.compose %v391, %v390
    %v393 = vextract.low.u32 %v392
    %v394 = vextract.high.u32 %v392
    %v395 = vmul.u32.u64.compose %v391, %v386
    %v396 = vextract.low.u32 %v395
    %v397 = vextract.high.u32 %v395
    %v398 = vmul.u32 %v391, %v382
    %v399 = vadd.s32 %v394, %v396
    %vm400 = vc.u32 %v394, %v396
    %v401 = vadd.s32 %v397, 1
    %v402 = vsel %vm400, %v401, %v397
    %v403 = vadd.s32 %v398, %v402
    %v404 = vadd.s32 %v403, 536870912
    %v405 = vshrl.u32 %v404, 30
    %v406 = vshll.u32 %v405, 30
    %v407 = vsub.s32 %v403, %v406
    %vm408 = vcmp.lt.s32.totalorder %v407, 0
    %v409 = vsub.s32 0, %v407
    %v410 = vsel %vm408, %v409, %v407
    %v411 = vclz %v410
    %v412 = vsub.s32 %v411, 2
    %vm413 = vcmp.gt.s32.totalorder 0, %v412
    %v414 = vsel %vm413, 0, %v412
    %v415 = vsub.s32 32, %v414
    %v416 = vshll.u32 %v407, %v414
    %v417 = vshrl.u32 %v399, %v415
    %v418 = vor.u32 %v416, %v417
    %v419 = vsub.s32 4294967266, %v414
    %v420 = vadd.s32 %v419, 127
    %v421 = vshll.u32 %v420, 23
    %v422 = vor.u32 4788187, %v421
    %v423 = vand.u32 2147483647, %v422
    %v425 = vcvt.s32.f32 %v418
    %v426 = vmul.f32 %v425, %v423
    %v427 = vxor.u32 %v426, 2147483648
    %v428 = vsel %vm345, %v427, %v426
    %v429 = vsub.s32 4, %v405
    %v430 = vsel %vm345, %v429, %v405
    %v431 = vsel %vm344, %v342, %v428
    %v432 = vsel %vm344, 0, %v430
    %v433 = vcosq.f32.pop %v431
    %v434 = vsinq.f32.pop %v431
    %vm435 = vweird.f32 %v342
    %v436 = vadd.s32 %v432, 3
    %v437 = vand.u32 %v436, 3
    %vm438 = vcmp.lt.s32.totalorder %v437, 2
    %vm439 = vcmp.eq.s32.totalorder %v437, 0
    %v440 = vxor.u32 %v434, 2147483648
    %v441 = vsel %vm439, %v433, %v440
    %vm442 = vcmp.eq.s32.totalorder %v437, 2
    %v443 = vxor.u32 %v433, 2147483648
    %v444 = vsel %vm442, %v443, %v434
    %v445 = vsel %vm438, %v441, %v444
    %v446 = vsel %vm435, nan, %v445
    %v447 = vpack.c.bf16 %v446, %v446
    %v448 = vld [vmem:[%s2] sm:$0xff]
    %v449 = vld [vmem:[%s2 + $0x8] sm:$0xff]
    %v450 = vld [vmem:[%s2 + $0x10] sm:$0xff]
    %v451 = vld [vmem:[%s2 + $0x18] sm:$0xff]
    %v452 = vld [vmem:[%s2 + $0x20] sm:$0xff]
    %v453 = vld [vmem:[%s2 + $0x28] sm:$0xff]
    %v454 = vld [vmem:[%s2 + $0x30] sm:$0xff]
    %v455 = vld [vmem:[%s2 + $0x38] sm:$0xff]
    %v457 = vlaneseq
    %v458 = vshrl.u32 %v457, 7
    %v459 = vsub.s32 0, %v458
    %v460 = vrot.slane %v325, %v459
    %v461 = vlaneseq
    %v462 = vshrl.u32 %v461, 7
    %v463 = vsub.s32 1, %v462
    %v464 = vrot.slane %v325, %v463
    %v475 = vunpack.c.l.b16 %v448
    %v476 = vunpack.c.h.b16 %v448
    %v477 = vunpack.c.l.b16 %v449
    %v478 = vunpack.c.h.b16 %v449
    %v479 = vunpack.c.l.b16 %v450
    %v480 = vunpack.c.h.b16 %v450
    %v481 = vunpack.c.l.b16 %v451
    %v482 = vunpack.c.h.b16 %v451
    %v483 = vunpack.c.l.b16 %v452
    %v484 = vunpack.c.h.b16 %v452
    %v485 = vunpack.c.l.b16 %v453
    %v486 = vunpack.c.h.b16 %v453
    %v487 = vunpack.c.l.b16 %v454
    %v488 = vunpack.c.h.b16 %v454
    %v489 = vunpack.c.l.b16 %v455
    %v490 = vunpack.c.h.b16 %v455
    %v491 = vpack.c.b16 %v477, %v475
    %v492 = vpack.c.b16 %v478, %v476
    %v493 = vpack.c.b16 %v481, %v479
    %v494 = vpack.c.b16 %v482, %v480
    %v495 = vpack.c.b16 %v485, %v483
    %v496 = vpack.c.b16 %v486, %v484
    %v497 = vpack.c.b16 %v489, %v487
    %v498 = vpack.c.b16 %v490, %v488
    %vm507 = vcmask 523264
    %v509 = vsel %vm507, %v447, 0
    %511 = vmatprep.subr.bf16.mxu0 %v492
    %512 = vmatpush1.bf16.msra.mxu0 %v491
    %513 = vmatprep.subr.bf16.mxu0 %v494
    %514 = vmatpush1.bf16.msra.mxu0 %v493
    %515 = vmatprep.subr.bf16.mxu0 %v496
    %516 = vmatpush1.bf16.msra.mxu0 %v495
    %517 = vmatprep.subr.bf16.mxu0 %v498
    %518 = vmatpush1.bf16.msra.mxu0 %v497
    %519 = vmatprep.subr.bf16.mxu0 0
    %520 = vmatpush1.bf16.msra.mxu0 0
    %521 = vmatprep.subr.bf16.mxu0 0
    %522 = vmatpush1.bf16.msra.mxu0 0
    %523 = vmatprep.subr.bf16.mxu0 0
    %524 = vmatpush1.bf16.msra.mxu0 0
    %525 = vmatprep.subr.bf16.mxu0 0
    %526 = vmatpush1.bf16.msra.mxu0 0
    %527 = vmatprep.subr.bf16.mxu0 0
    %528 = vmatpush1.bf16.msra.mxu0 0
    %529 = vmatprep.subr.bf16.mxu0 0
    %530 = vmatpush1.bf16.msra.mxu0 0
    %531 = vmatprep.subr.bf16.mxu0 0
    %532 = vmatpush1.bf16.msra.mxu0 0
    %533 = vmatprep.subr.bf16.mxu0 0
    %534 = vmatpush1.bf16.msra.mxu0 0
    %535 = vmatprep.subr.bf16.mxu0 0
    %536 = vmatpush1.bf16.msra.mxu0 0
    %537 = vmatprep.subr.bf16.mxu0 0
    %538 = vmatpush1.bf16.msra.mxu0 0
    %539 = vmatprep.subr.bf16.mxu0 0
    %540 = vmatpush1.bf16.msra.mxu0 0
    %541 = vmatprep.subr.bf16.mxu0 0
    %542 = vmatpush1.bf16.msra.mxu0 0
    %543 = vmatprep.mubr.bf16.mxu0 0
    %544 = vmatmul.mubr.bf16.gmra.mrb[0].mxu0 %v509
    %v545 = vpop.f32.mrb[0].mxu0
    %v546 = vadd.f32 %v460, %v545
    %v547 = vpop.f32.mrb[0].mxu0
    %v548 = vadd.f32 %v464, %v547
    %v549 = vpop.f32.mrb[0].mxu0
    %v550 = vpop.f32.mrb[0].mxu0
    %551 = vdwg.mxu0
    %v552 = vxor.u32 %v546, 2147483648
    %v553 = vxor.u32 %v548, 2147483648
    %v554 = vmul.f32 %v552, 1.442695
    %v555 = vpow.pop %v554
    %v556 = vmul.f32 %v553, 1.442695
    %v557 = vpow.pop %v556
    %v558 = vadd.f32 %v555, 1.0
    %v559 = vadd.f32 %v557, 1.0
    %v560 = vrcp.pop %v558
    %v561 = vmul.f32 1.0, %v560
    %v562 = vrcp.pop %v559
    %v563 = vmul.f32 1.0, %v562
    %v564 = vmul.f32 %v546, %v561
    %v565 = vmul.f32 %v548, %v563
    %s566 = smul.u32 4, 32
    %s567 = smul.u32 %s566, 2
    %s568 = sshll.u32 %s567, 4
    %569 = dma.done [#allocation3], %s568
    %v570 = vpack.c.bf16 %v564, %v564
    %v571 = vpack.c.bf16 %v565, %v565
    %v572 = vld [vmem:[#allocation2] sm:$0xff]
    %v573 = vld [vmem:[#allocation2 + $0x8] sm:$0xff]
    %v574 = vld [vmem:[#allocation2 + $0x10] sm:$0xff]
    %v575 = vld [vmem:[#allocation2 + $0x18] sm:$0xff]
    %v576 = vld [vmem:[#allocation2 + $0x20] sm:$0xff]
    %v577 = vld [vmem:[#allocation2 + $0x28] sm:$0xff]
    %v578 = vld [vmem:[#allocation2 + $0x30] sm:$0xff]
    %v579 = vld [vmem:[#allocation2 + $0x38] sm:$0xff]
    %v580 = vld [vmem:[#allocation2 + $0x40] sm:$0xff]
    %v581 = vld [vmem:[#allocation2 + $0x48] sm:$0xff]
    %v582 = vld [vmem:[#allocation2 + $0x50] sm:$0xff]
    %v583 = vld [vmem:[#allocation2 + $0x58] sm:$0xff]
    %v584 = vld [vmem:[#allocation2 + $0x60] sm:$0xff]
    %v585 = vld [vmem:[#allocation2 + $0x68] sm:$0xff]
    %v586 = vld [vmem:[#allocation2 + $0x70] sm:$0xff]
    %v587 = vld [vmem:[#allocation2 + $0x78] sm:$0xff]
    %v588 = vld [vmem:[#allocation2 + $0x80] sm:$0xff]
    %v589 = vld [vmem:[#allocation2 + $0x88] sm:$0xff]
    %v590 = vld [vmem:[#allocation2 + $0x90] sm:$0xff]
    %v591 = vld [vmem:[#allocation2 + $0x98] sm:$0xff]
    %v592 = vld [vmem:[#allocation2 + $0xa0] sm:$0xff]
    %v593 = vld [vmem:[#allocation2 + $0xa8] sm:$0xff]
    %v594 = vld [vmem:[#allocation2 + $0xb0] sm:$0xff]
    %v595 = vld [vmem:[#allocation2 + $0xb8] sm:$0xff]
    %v596 = vld [vmem:[#allocation2 + $0xc0] sm:$0xff]
    %v597 = vld [vmem:[#allocation2 + $0xc8] sm:$0xff]
    %v598 = vld [vmem:[#allocation2 + $0xd0] sm:$0xff]
    %v599 = vld [vmem:[#allocation2 + $0xd8] sm:$0xff]
    %v600 = vld [vmem:[#allocation2 + $0xe0] sm:$0xff]
    %v601 = vld [vmem:[#allocation2 + $0xe8] sm:$0xff]
    %v602 = vld [vmem:[#allocation2 + $0xf0] sm:$0xff]
    %v603 = vld [vmem:[#allocation2 + $0xf8] sm:$0xff]
    %v605 = vlaneseq
    %v606 = vshrl.u32 %v605, 7
    %v607 = vsub.s32 0, %v606
    %v608 = vrot.slane %v327, %v607
    %v609 = vlaneseq
    %v610 = vshrl.u32 %v609, 7
    %v611 = vsub.s32 1, %v610
    %v612 = vrot.slane %v327, %v611
    %615 = vmatprep.subr.bf16.mxu0 %v573
    %616 = vmatpush1.bf16.msra.mxu0 %v572
    %617 = vmatprep.subr.bf16.mxu0 %v575
    %618 = vmatpush1.bf16.msra.mxu0 %v574
    %619 = vmatprep.subr.bf16.mxu0 %v577
    %620 = vmatpush1.bf16.msra.mxu0 %v576
    %621 = vmatprep.subr.bf16.mxu0 %v579
    %622 = vmatpush1.bf16.msra.mxu0 %v578
    %623 = vmatprep.subr.bf16.mxu0 %v581
    %624 = vmatpush1.bf16.msra.mxu0 %v580
    %625 = vmatprep.subr.bf16.mxu0 %v583
    %626 = vmatpush1.bf16.msra.mxu0 %v582
    %627 = vmatprep.subr.bf16.mxu0 %v585
    %628 = vmatpush1.bf16.msra.mxu0 %v584
    %629 = vmatprep.subr.bf16.mxu0 %v587
    %630 = vmatpush1.bf16.msra.mxu0 %v586
    %631 = vmatprep.subr.bf16.mxu0 %v589
    %632 = vmatpush1.bf16.msra.mxu0 %v588
    %633 = vmatprep.subr.bf16.mxu0 %v591
    %634 = vmatpush1.bf16.msra.mxu0 %v590
    %635 = vmatprep.subr.bf16.mxu0 %v593
    %636 = vmatpush1.bf16.msra.mxu0 %v592
    %637 = vmatprep.subr.bf16.mxu0 %v595
    %638 = vmatpush1.bf16.msra.mxu0 %v594
    %639 = vmatprep.subr.bf16.mxu0 %v597
    %640 = vmatpush1.bf16.msra.mxu0 %v596
    %641 = vmatprep.subr.bf16.mxu0 %v599
    %642 = vmatpush1.bf16.msra.mxu0 %v598
    %643 = vmatprep.subr.bf16.mxu0 %v601
    %644 = vmatpush1.bf16.msra.mxu0 %v600
    %645 = vmatprep.subr.bf16.mxu0 %v603
    %646 = vmatpush1.bf16.msra.mxu0 %v602
    %647 = vmatprep.mubr.bf16.mxu0 %v571
    %648 = vmatmul.mubr.bf16.gmra.mrb[0].mxu0 %v570
    %v649 = vpop.f32.mrb[0].mxu0
    %v650 = vadd.f32 %v608, %v649
    %v651 = vpop.f32.mrb[0].mxu0
    %v652 = vadd.f32 %v612, %v651
    %v653 = vpop.f32.mrb[0].mxu0
    %v654 = vpop.f32.mrb[0].mxu0
    %655 = vdwg.mxu0
    %656 = vst [vmem:[#allocation4] sm:$0xff] %v650
    %657 = vst [vmem:[#allocation4 + $0x8] sm:$0xff] %v652
    // Predicated region
    $region51: #{apply.1} parent=1 // pred_check
      _
    $region52: #{apply.1} parent=1 // pred_check_branch
      %659 = sbr.rel (0) target = $region54
    $region53: #{apply.1} parent=1 // pred_region
      %s661 = ssub.s32 256, 256
      %662 = vsyncadd [#allocation5], %s661
      %s664 = sshll.u32 [#allocation4], 4
      %s665 = int_to_ptr.vmem [resolvable:$true] %s664
      %667 = dma.vmem_to_hbm [thread:$0]  %s665, 256, %s4, [#allocation5]
    $region54: #{apply.1} parent=1 // pred_fallthru
      _
    // Predicated region
    $region55: #{apply.1} parent=1 // pred_check
      _
    $region56: #{apply.1} parent=1 // pred_check_branch
      %669 = sbr.rel (0) target = $region58
    $region57: #{apply.1} parent=1 // pred_region
      %670 = dma.done [#allocation5], 256
    $region58: #{apply.1} parent=1 // pred_fallthru
      _
    %671 = vsyncpa [#allocation5], 1
  %672 = vsyncmov [#allocation3]
  %s673 = vpop.sfrf %672
  %p674 = scmp.eq.s32.totalorder %s673, 0
  %p675 = pneg %p674
  %677 = shalt.err (%p675)

</llo_original>
